<compile_context>
chip_gen: v7x
topology: tpu7x:2x2x1
jax: 0.10.0
libtpu: 0.0.40
codegen_flags: <defaults>
</compile_context>

<pallas_src>
import jax
import jax.numpy as jnp
from jax import lax
from jax.experimental import pallas as pl
from jax.experimental.pallas import tpu as pltpu

HIDDEN = 64
LANES = 2 * HIDDEN  # 128: actor hidden | packed heads


def _round_up(n, m):
    return ((n + m - 1) // m) * m


def fused_policy_kernel(x_ref, w0_ref, w_ref, b_ref, out_ref):
    wdt = w0_ref.dtype                               # f32 or bf16 (MXU operands)
    x = x_ref[...]                                   # (tb, num_inputs) f32

    # layer 0: lanes 0..63 = actor, 64..127 = critic
    h0 = jnp.tanh(
        jnp.dot(x.astype(wdt), w0_ref[...], preferred_element_type=jnp.float32)
        + b_ref[0:1, :])

    # layer 2: block-diagonal weight keeps the two branches independent
    h1 = jnp.tanh(
        jnp.dot(h0.astype(wdt), w_ref[0], preferred_element_type=jnp.float32)
        + b_ref[1:2, :])

    # heads: actor rows -> logits in lanes [64, 64+A), critic rows -> value in
    # lane 64+A; lanes [0, 64) of `heads` are exactly zero by construction.
    heads = (jnp.dot(h1.astype(wdt), w_ref[1], preferred_element_type=jnp.float32)
             + b_ref[2:3, :])

    # Single lane-dense slab: [hidden_actor | logits | value | pad]
    lane = lax.broadcasted_iota(jnp.int32, h1.shape, 1)
    out_ref[...] = jnp.where(lane < HIDDEN, h1, heads)


def pack_params(p, *, use_bf16=False):
    """Pack the 12 MLPBase+Categorical tensors into 3 fused slabs (host-side)."""
    H, L = HIDDEN, LANES
    num_actions = p["dist_w"].shape[1]
    assert num_actions + 1 <= H, "packed heads must fit the upper 64 lanes"

    w0 = jnp.concatenate([p["actor_w0"], p["critic_w0"]], axis=1)      # (nin, 128)
    b0 = jnp.concatenate([p["actor_b0"], p["critic_b0"]], axis=1)      # (1, 128)

    w2 = jnp.zeros((L, L), jnp.float32)
    w2 = w2.at[:H, :H].set(p["actor_w2"]).at[H:, H:].set(p["critic_w2"])
    b2 = jnp.concatenate([p["actor_b2"], p["critic_b2"]], axis=1)      # (1, 128)

    # Heads land in the UPPER 64 lanes so one output slab carries everything.
    wh = jnp.zeros((L, L), jnp.float32)
    wh = wh.at[:H, H:H + num_actions].set(p["dist_w"])
    wh = wh.at[H:, H + num_actions:H + num_actions + 1].set(p["critic_linear_w"])
    bh = jnp.zeros((1, L), jnp.float32)
    bh = bh.at[:, H:H + num_actions].set(p["dist_b"])
    bh = bh.at[:, H + num_actions:H + num_actions + 1].set(p["critic_linear_b"])

    wdt = jnp.bfloat16 if use_bf16 else jnp.float32
    return {
        "w0": w0.astype(wdt),                        # (num_inputs, 128)
        "w_stack": jnp.stack([w2, wh]).astype(wdt),  # (2, 128, 128)
        "bias": jnp.concatenate([b0, b2, bh], 0),    # (3, 128) f32 always
        "num_actions": num_actions,
    }


def policy_forward(x, packed, *, tile_b=2048):
    """x: (B, num_inputs) f32 -> (value (B,1), actor_features (B,64), logits (B,A))."""
    w0, w_stack, bias = packed["w0"], packed["w_stack"], packed["bias"]
    num_actions = packed["num_actions"]
    B, num_inputs = x.shape
    L = LANES

    # Batch tile: big (amortize per-step overhead), multiple of 8, but capped at
    # ~ceil(B/2) so the parallel grid has >= 2 steps for v7x's two TensorCores.
    B8 = _round_up(B, 8)
    if B8 >= 16:
        tb = min(tile_b, _round_up(pl.cdiv(B8, 2), 8))
    else:
        tb = B8
    tb = max(tb, 8)
    Bp = _round_up(B, tb)
    if Bp != B:
        x = jnp.pad(x, ((0, Bp - B), (0, 0)))

    # VMEM budget: x (lane-padded to 128) + output, both double-buffered, plus
    # the resident weight slabs.  Floor at 16 MiB (v5e default), cap at 32 MiB.
    lane_bytes = L * 4
    vmem_est = (4 * tb * lane_bytes
                + 2 * (w0.size * w0.dtype.itemsize
                       + w_stack.size * w_stack.dtype.itemsize
                       + bias.size * 4))
    vmem_limit = int(min(max(vmem_est + (4 << 20), 16 << 20), 32 << 20))

    out = pl.pallas_call(
        fused_policy_kernel,
        out_shape=jax.ShapeDtypeStruct((Bp, L), jnp.float32),
        grid_spec=pltpu.PrefetchScalarGridSpec(
            num_scalar_prefetch=0,
            grid=(Bp // tb,),
            in_specs=[
                pl.BlockSpec((tb, num_inputs), lambda i: (i, 0)),
                pl.BlockSpec((num_inputs, L), lambda i: (0, 0)),   # VMEM-resident
                pl.BlockSpec((2, L, L), lambda i: (0, 0, 0)),      # VMEM-resident
                pl.BlockSpec((3, L), lambda i: (0, 0)),            # VMEM-resident
            ],
            out_specs=pl.BlockSpec((tb, L), lambda i: (i, 0)),
        ),
        compiler_params=pltpu.CompilerParams(
            dimension_semantics=("parallel",),
            vmem_limit_bytes=vmem_limit),
    )(x, w0, w_stack, bias)

    if Bp != B:
        out = out[:B]
    actor_features = out[:, :HIDDEN]
    logits = out[:, HIDDEN:HIDDEN + num_actions]
    value = out[:, HIDDEN + num_actions:HIDDEN + num_actions + 1]
    return value, actor_features, logits


def init_params(key, num_inputs, hidden, num_actions):
    """Deterministic synthetic parameters (shapes match MLPBase + Categorical)."""
    ks = jax.random.split(key, 6)
    scale = 0.1

    def lin(k, fan_in, fan_out):
        return scale * jax.random.normal(k, (fan_in, fan_out), jnp.float32)

    return {
        "actor_w0": lin(ks[0], num_inputs, hidden),
        "actor_b0": jnp.zeros((1, hidden), jnp.float32),
        "actor_w2": lin(ks[1], hidden, hidden),
        "actor_b2": jnp.zeros((1, hidden), jnp.float32),
        "critic_w0": lin(ks[2], num_inputs, hidden),
        "critic_b0": jnp.zeros((1, hidden), jnp.float32),
        "critic_w2": lin(ks[3], hidden, hidden),
        "critic_b2": jnp.zeros((1, hidden), jnp.float32),
        "critic_linear_w": lin(ks[4], hidden, 1),
        "critic_linear_b": jnp.zeros((1, 1), jnp.float32),
        "dist_w": lin(ks[5], hidden, num_actions),
        "dist_b": jnp.zeros((1, num_actions), jnp.float32),
    }


def policy_forward_ref(x, p):
    ha = jnp.tanh(x @ p["actor_w0"] + p["actor_b0"])
    ha = jnp.tanh(ha @ p["actor_w2"] + p["actor_b2"])
    hc = jnp.tanh(x @ p["critic_w0"] + p["critic_b0"])
    hc = jnp.tanh(hc @ p["critic_w2"] + p["critic_b2"])
    value = hc @ p["critic_linear_w"] + p["critic_linear_b"]
    logits = ha @ p["dist_w"] + p["dist_b"]
    return value, ha, logits


if __name__ == "__main__":
    NUM_INPUTS = 16   # obs_shape = (16,)
    NUM_ACTIONS = 6   # Discrete(6)

    key = jax.random.PRNGKey(0)
    k_x, k_p, k_big = jax.random.split(key, 3)
    params = init_params(k_p, NUM_INPUTS, HIDDEN, NUM_ACTIONS)
    packed = pack_params(params)

    # Small batch (single grid step; act()-style call).
    x_small = jax.random.normal(k_x, (8, NUM_INPUTS), jnp.float32)
    v, a, l = policy_forward(x_small, packed)
    jax.block_until_ready((v, a, l))
    v_r, a_r, l_r = policy_forward_ref(x_small, params)
    assert jnp.allclose(v, v_r, atol=1e-5, rtol=1e-5)
    assert jnp.allclose(a, a_r, atol=1e-5, rtol=1e-5)
    assert jnp.allclose(l, l_r, atol=1e-5, rtol=1e-5)

    # Rollout-sized batch (exercises >=2 parallel grid steps + row padding).
    x_big = jax.random.normal(k_big, (1000, NUM_INPUTS), jnp.float32)
    v, a, l = policy_forward(x_big, packed)
    jax.block_until_ready((v, a, l))
    v_r, a_r, l_r = policy_forward_ref(x_big, params)
    assert jnp.allclose(v, v_r, atol=1e-5, rtol=1e-5)
    assert jnp.allclose(a, a_r, atol=1e-5, rtol=1e-5)
    assert jnp.allclose(l, l_r, atol=1e-5, rtol=1e-5)

    # Optional bf16-at-the-dot path (v6e/v7x MXU lever); loose tolerance.
    packed_bf16 = pack_params(params, use_bf16=True)
    v, a, l = policy_forward(x_big, packed_bf16)
    jax.block_until_ready((v, a, l))
    assert jnp.allclose(v, v_r, atol=5e-2, rtol=5e-2)
    assert jnp.allclose(a, a_r, atol=5e-2, rtol=5e-2)
    assert jnp.allclose(l, l_r, atol=5e-2, rtol=5e-2)

    print("KERNEL_OK")
</pallas_src>

<mosaic_0001>
module attributes {stable_mosaic.version = 11 : i64} {
  func.func @fused_policy_kernel(%arg0: i32, %arg1: memref<8x16xf32, #tpu.memory_space<vmem>>, %arg2: memref<16x128xf32, #tpu.memory_space<vmem>>, %arg3: memref<2x128x128xf32, #tpu.memory_space<vmem>>, %arg4: memref<3x128xf32, #tpu.memory_space<vmem>>, %arg5: memref<8x128xf32, #tpu.memory_space<vmem>>) attributes {dimension_semantics = [#tpu.dimension_semantics<parallel>], iteration_bounds = array<i64: 1>, scalar_prefetch = 0 : i64, scratch_operands = 0 : i64, tpu.core_type = #tpu.core_type<tc>, window_params = [{transform_indices = @transform_0, window_bounds = array<i64: 8, 16>}, {pipeline_mode = #tpu.pipeline_mode<synchronous>, transform_indices = @transform_1, window_bounds = array<i64: 16, 128>}, {pipeline_mode = #tpu.pipeline_mode<synchronous>, transform_indices = @transform_2, window_bounds = array<i64: 2, 128, 128>}, {pipeline_mode = #tpu.pipeline_mode<synchronous>, transform_indices = @transform_3, window_bounds = array<i64: 3, 128>}, {transform_indices = @transform_4, window_bounds = array<i64: 8, 128>}]} {
    %c0 = arith.constant 0 : index
    %c0_0 = arith.constant 0 : index
    %0 = vector.load %arg1[%c0, %c0_0] : memref<8x16xf32, #tpu.memory_space<vmem>>, vector<8x16xf32>
    %c0_1 = arith.constant 0 : index
    %c0_2 = arith.constant 0 : index
    %1 = vector.load %arg2[%c0_1, %c0_2] : memref<16x128xf32, #tpu.memory_space<vmem>>, vector<16x128xf32>
    %cst = arith.constant dense<0.000000e+00> : vector<8x128xf32>
    %2 = tpu.matmul %0, %1, %cst {dimension_numbers = #tpu.dot_dimension_numbers<[1], [0], [0], [1], [0, 0, 1, 1], [], []>} : vector<8x16xf32>, vector<16x128xf32>, vector<8x128xf32> -> vector<8x128xf32>
    %c0_3 = arith.constant 0 : index
    %c0_4 = arith.constant 0 : index
    %3 = vector.load %arg4[%c0_3, %c0_4] : memref<3x128xf32, #tpu.memory_space<vmem>>, vector<1x128xf32>
    %4 = vector.broadcast %3 : vector<1x128xf32> to vector<8x128xf32>
    %5 = arith.addf %2, %4 : vector<8x128xf32>
    %6 = math.tanh %5 : vector<8x128xf32>
    %c0_5 = arith.constant 0 : index
    %c0_6 = arith.constant 0 : index
    %c0_7 = arith.constant 0 : index
    %7 = vector.load %arg3[%c0_5, %c0_6, %c0_7] : memref<2x128x128xf32, #tpu.memory_space<vmem>>, vector<1x128x128xf32>
    %8 = vector.shape_cast %7 : vector<1x128x128xf32> to vector<128x128xf32>
    %cst_8 = arith.constant dense<0.000000e+00> : vector<8x128xf32>
    %9 = tpu.matmul %6, %8, %cst_8 {dimension_numbers = #tpu.dot_dimension_numbers<[1], [0], [0], [1], [0, 0, 1, 1], [], []>} : vector<8x128xf32>, vector<128x128xf32>, vector<8x128xf32> -> vector<8x128xf32>
    %c1 = arith.constant 1 : index
    %c0_9 = arith.constant 0 : index
    %10 = vector.load %arg4[%c1, %c0_9] : memref<3x128xf32, #tpu.memory_space<vmem>>, vector<1x128xf32>
    %11 = vector.broadcast %10 : vector<1x128xf32> to vector<8x128xf32>
    %12 = arith.addf %9, %11 : vector<8x128xf32>
    %13 = math.tanh %12 : vector<8x128xf32>
    %c1_10 = arith.constant 1 : index
    %c0_11 = arith.constant 0 : index
    %c0_12 = arith.constant 0 : index
    %14 = vector.load %arg3[%c1_10, %c0_11, %c0_12] : memref<2x128x128xf32, #tpu.memory_space<vmem>>, vector<1x128x128xf32>
    %15 = vector.shape_cast %14 : vector<1x128x128xf32> to vector<128x128xf32>
    %cst_13 = arith.constant dense<0.000000e+00> : vector<8x128xf32>
    %16 = tpu.matmul %13, %15, %cst_13 {dimension_numbers = #tpu.dot_dimension_numbers<[1], [0], [0], [1], [0, 0, 1, 1], [], []>} : vector<8x128xf32>, vector<128x128xf32>, vector<8x128xf32> -> vector<8x128xf32>
    %c2 = arith.constant 2 : index
    %c0_14 = arith.constant 0 : index
    %17 = vector.load %arg4[%c2, %c0_14] : memref<3x128xf32, #tpu.memory_space<vmem>>, vector<1x128xf32>
    %18 = vector.broadcast %17 : vector<1x128xf32> to vector<8x128xf32>
    %19 = arith.addf %16, %18 : vector<8x128xf32>
    %20 = tpu.iota {dimensions = array<i32: 1>} : vector<8x128xi32>
    %c64_i32 = arith.constant 64 : i32
    %21 = vector.broadcast %c64_i32 : i32 to vector<8x128xi32>
    %22 = arith.cmpi slt, %20, %21 : vector<8x128xi32>
    %23 = arith.select %22, %13, %19 : vector<8x128xi1>, vector<8x128xf32>
    %c0_15 = arith.constant 0 : index
    %c0_16 = arith.constant 0 : index
    %24 = vector.load %arg5[%c0_15, %c0_16] : memref<8x128xf32, #tpu.memory_space<vmem>>, vector<8x128xf32>
    tpu.vector_store %arg5[%c0_15, %c0_16], %23 {strides = array<i32>} : memref<8x128xf32, #tpu.memory_space<vmem>>, vector<8x128xf32>,
    return
  }
  func.func @transform_0(%arg0: i32) -> (i32, i32) {
    %c0_i32 = arith.constant 0 : i32
    %c0_i32_0 = arith.constant 0 : i32
    return %arg0, %c0_i32 : i32, i32
  }
  func.func @transform_1(%arg0: i32) -> (i32, i32) {
    %c0_i32 = arith.constant 0 : i32
    %c0_i32_0 = arith.constant 0 : i32
    %c0_i32_1 = arith.constant 0 : i32
    return %c0_i32, %c0_i32_0 : i32, i32
  }
  func.func @transform_2(%arg0: i32) -> (i32, i32, i32) {
    %c0_i32 = arith.constant 0 : i32
    %c0_i32_0 = arith.constant 0 : i32
    %c0_i32_1 = arith.constant 0 : i32
    %c0_i32_2 = arith.constant 0 : i32
    return %c0_i32, %c0_i32_0, %c0_i32_1 : i32, i32, i32
  }
  func.func @transform_3(%arg0: i32) -> (i32, i32) {
    %c0_i32 = arith.constant 0 : i32
    %c0_i32_0 = arith.constant 0 : i32
    %c0_i32_1 = arith.constant 0 : i32
    return %c0_i32, %c0_i32_0 : i32, i32
  }
  func.func @transform_4(%arg0: i32) -> (i32, i32) {
    %c0_i32 = arith.constant 0 : i32
    %c0_i32_0 = arith.constant 0 : i32
    return %arg0, %c0_i32 : i32, i32
  }
}

</mosaic_0001>

<llo_original>
// kernel: tpu_custom_call.1
$region0: #{tpu_custom_call.1}
  #allocation0 [shape = 'u32[]', space=smem, size = 0x4, offset = 0x4, fixed_abs, tag = 'smem constant byte address 0x4 - core index']
  #allocation1 [shape = 'u32[144,128]{1,0:T(1,128)}', space=vmem, size = 0x12000, scoped, tag = 'internal scratch']
  %s0 = inlined_call_operand.hbm [shape: f32[8,16], index: 0, kind: input, shape index: {}]
  %s1 = inlined_call_operand.hbm [shape: f32[16,128], index: 1, kind: input, shape index: {}]
  %s2 = inlined_call_operand.hbm [shape: f32[2,128,128], index: 2, kind: input, shape index: {}]
  %s3 = inlined_call_operand.vmem [shape: f32[3,128], index: 3, kind: input, shape index: {}]
  %s4 = inlined_call_operand.hbm [shape: f32[8,128], index: 4, kind: output, shape index: {}]
  %s5 = sld [smem:[#allocation0]]
  $region38: #{tpu_custom_call.1} parent=0
    _
  %s7 = ssub.s32 1, %s5
  %s8 = scalar_select 0, %s7, %s5
  $region1: #{tpu_custom_call.1} parent=0
    #allocation2 [shape = 'u8[4096]{0}', space=vmem, size = 0x1000, scoped, tag = 'input window, operand 0, single buffered']
    #allocation3 [shape = 's32[1]{0}', space=sflag, size = 0x4, scoped, tag = 'scoped memory for tpu_custom_call.1']
    #allocation4 [shape = 's32[1]{0}', space=sflag, size = 0x4, scoped, tag = 'scoped memory for tpu_custom_call.1']
    #allocation5 [shape = 'u8[8192]{0}', space=vmem, size = 0x2000, scoped, tag = 'input window, operand 1, single buffered']
    #allocation6 [shape = 's32[1]{0}', space=sflag, size = 0x4, scoped, tag = 'scoped memory for tpu_custom_call.1']
    #allocation7 [shape = 'u8[131072]{0}', space=vmem, size = 0x20000, scoped, tag = 'input window, operand 2, single buffered']
    #allocation8 [shape = 'u8[4096]{0}', space=vmem, size = 0x1000, scoped, tag = 'output window, operand 0, single buffered']
    %9 = vsyncpa [#allocation3], 0
    %10 = vsyncpa [#allocation6], 0
    %11 = vsyncpa [#allocation4], 0
    // Predicated region
    $region2: #{tpu_custom_call.1} parent=1 // pred_check
      _
    $region3: #{tpu_custom_call.1} parent=1 // pred_check_branch
      %13 = sbr.rel (0) target = $region5
    $region4: #{tpu_custom_call.1} parent=1 // pred_region
      %s15 = ssub.s32 128, 128
      %16 = vsyncadd [#allocation3], %s15
      %s18 = sshll.u32 [#allocation2], 4
      %s19 = int_to_ptr.vmem [resolvable:$true] %s18
      %21 = dma.hbm_to_vmem [thread:$0]  %s0, 128, %s19, [#allocation3]
    $region5: #{tpu_custom_call.1} parent=1 // pred_fallthru
      _
    // Predicated region
    $region6: #{tpu_custom_call.1} parent=1 // pred_check
      _
    $region7: #{tpu_custom_call.1} parent=1 // pred_check_branch
      %23 = sbr.rel (0) target = $region9
    $region8: #{tpu_custom_call.1} parent=1 // pred_region
      %s25 = ssub.s32 256, 256
      %26 = vsyncadd [#allocation6], %s25
      %s27 = sshll.u32 [#allocation5], 4
      %s28 = int_to_ptr.vmem [resolvable:$true] %s27
      %33 = dma.hbm_to_vmem [thread:$0]  %s1, 256, %s28, [#allocation6], 128, 128, 8
    $region9: #{tpu_custom_call.1} parent=1 // pred_fallthru
      _
    // Predicated region
    $region10: #{tpu_custom_call.1} parent=1 // pred_check
      _
    $region11: #{tpu_custom_call.1} parent=1 // pred_check_branch
      %35 = sbr.rel (0) target = $region13
    $region12: #{tpu_custom_call.1} parent=1 // pred_region
      %s37 = ssub.s32 4096, 4096
      %38 = vsyncadd [#allocation6], %s37
      %s39 = sshll.u32 [#allocation7], 4
      %s40 = int_to_ptr.vmem [resolvable:$true] %s39
      %45 = dma.hbm_to_vmem [thread:$0]  %s2, 4096, %s40, [#allocation6], 128, 128, 8
    $region13: #{tpu_custom_call.1} parent=1 // pred_fallthru
      _
    // Predicated region
    $region14: #{tpu_custom_call.1} parent=1 // pred_check
      _
    $region15: #{tpu_custom_call.1} parent=1 // pred_check_branch
      %47 = sbr.rel (0) target = $region17
    $region16: #{tpu_custom_call.1} parent=1 // pred_region
      _
    $region17: #{tpu_custom_call.1} parent=1 // pred_fallthru
      _
    // Predicated region
    $region18: #{tpu_custom_call.1} parent=1 // pred_check
      _
    $region19: #{tpu_custom_call.1} parent=1 // pred_check_branch
      %49 = sbr.rel (0) target = $region21
    $region20: #{tpu_custom_call.1} parent=1 // pred_region
      %50 = dma.done [#allocation3], 128
    $region21: #{tpu_custom_call.1} parent=1 // pred_fallthru
      _
    // Predicated region
    $region22: #{tpu_custom_call.1} parent=1 // pred_check
      _
    $region23: #{tpu_custom_call.1} parent=1 // pred_check_branch
      %52 = sbr.rel (0) target = $region25
    $region24: #{tpu_custom_call.1} parent=1 // pred_region
      %53 = dma.done [#allocation6], 256
    $region25: #{tpu_custom_call.1} parent=1 // pred_fallthru
      _
    // Predicated region
    $region26: #{tpu_custom_call.1} parent=1 // pred_check
      _
    $region27: #{tpu_custom_call.1} parent=1 // pred_check_branch
      %55 = sbr.rel (0) target = $region29
    $region28: #{tpu_custom_call.1} parent=1 // pred_region
      %56 = dma.done [#allocation6], 4096
    $region29: #{tpu_custom_call.1} parent=1 // pred_fallthru
      _
    %v57 = vld [vmem:[#allocation2] sm:$0xff]
    %v58 = vld [vmem:[#allocation5] sm:$0xff]
    %v59 = vld [vmem:[#allocation5 + $0x8] sm:$0xff]
    %v60 = vld [vmem:[%s3] sm:$0x1]
    %v61 = vlaneseq
    %v62 = vshrl.u32 %v61, 7
    %v63 = vsub.s32 0, %v62
    %v64 = vrot.slane %v60, %v63
    %vm65 = vcmask 130048
    %v67 = vsel %vm65, %v57, 0
    %69 = vmatprep.subr.mxu0 0.0
    %70 = vmatpush1.msra.mxu0 %v58
    %71 = vmatprep.subr.mxu0 0.0
    %72 = vmatpush1.msra.mxu0 %v59
    %73 = vmatprep.subr.mxu0 0.0
    %74 = vmatpush1.msra.mxu0 0.0
    %75 = vmatprep.subr.mxu0 0.0
    %76 = vmatpush1.msra.mxu0 0.0
    %77 = vmatprep.subr.mxu0 0.0
    %78 = vmatpush1.msra.mxu0 0.0
    %79 = vmatprep.subr.mxu0 0.0
    %80 = vmatpush1.msra.mxu0 0.0
    %81 = vmatprep.subr.mxu0 0.0
    %82 = vmatpush1.msra.mxu0 0.0
    %83 = vmatprep.subr.mxu0 0.0
    %84 = vmatpush1.msra.mxu0 0.0
    %85 = vmatprep.subr.mxu0 0.0
    %86 = vmatpush1.msra.mxu0 0.0
    %87 = vmatprep.subr.mxu0 0.0
    %88 = vmatpush1.msra.mxu0 0.0
    %89 = vmatprep.subr.mxu0 0.0
    %90 = vmatpush1.msra.mxu0 0.0
    %91 = vmatprep.subr.mxu0 0.0
    %92 = vmatpush1.msra.mxu0 0.0
    %93 = vmatprep.subr.mxu0 0.0
    %94 = vmatpush1.msra.mxu0 0.0
    %95 = vmatprep.subr.mxu0 0.0
    %96 = vmatpush1.msra.mxu0 0.0
    %97 = vmatprep.subr.mxu0 0.0
    %98 = vmatpush1.msra.mxu0 0.0
    %99 = vmatprep.subr.mxu0 0.0
    %100 = vmatpush1.msra.mxu0 0.0
    %101 = vmatprep.subr.mxu0 0.0
    %102 = vmatpush1.msra.mxu0 0.0
    %103 = vmatprep.subr.mxu0 0.0
    %104 = vmatpush1.msra.mxu0 0.0
    %105 = vmatprep.subr.mxu0 0.0
    %106 = vmatpush1.msra.mxu0 0.0
    %107 = vmatprep.subr.mxu0 0.0
    %108 = vmatpush1.msra.mxu0 0.0
    %109 = vmatprep.subr.mxu0 0.0
    %110 = vmatpush1.msra.mxu0 0.0
    %111 = vmatprep.subr.mxu0 0.0
    %112 = vmatpush1.msra.mxu0 0.0
    %113 = vmatprep.subr.mxu0 0.0
    %114 = vmatpush1.msra.mxu0 0.0
    %115 = vmatprep.subr.mxu0 0.0
    %116 = vmatpush1.msra.mxu0 0.0
    %117 = vmatprep.subr.mxu0 0.0
    %118 = vmatpush1.msra.mxu0 0.0
    %119 = vmatprep.subr.mxu0 0.0
    %120 = vmatpush1.msra.mxu0 0.0
    %121 = vmatprep.subr.mxu0 0.0
    %122 = vmatpush1.msra.mxu0 0.0
    %123 = vmatprep.subr.mxu0 0.0
    %124 = vmatpush1.msra.mxu0 0.0
    %125 = vmatprep.subr.mxu0 0.0
    %126 = vmatpush1.msra.mxu0 0.0
    %127 = vmatprep.subr.mxu0 0.0
    %128 = vmatpush1.msra.mxu0 0.0
    %129 = vmatprep.subr.mxu0 0.0
    %130 = vmatpush1.msra.mxu0 0.0
    %131 = vmatprep.subr.mxu0 0.0
    %132 = vmatpush1.msra.mxu0 0.0
    %133 = vmatprep.mubr.f32.mxu0 0.0
    %134 = vmatmul.mubr.f32.gmra.mrb[0].mxu0 %v67
    %v135 = vpop.f32.mrb[0].mxu0
    %v136 = vadd.f32 %v64, %v135
    %v137 = vpop.f32.mrb[0].mxu0
    %138 = vdwg.mxu0
    %v139 = vtanh.pop %v136
    %v140 = vld [vmem:[#allocation7] sm:$0xff]
    %v141 = vld [vmem:[#allocation7 + $0x8] sm:$0xff]
    %v142 = vld [vmem:[#allocation7 + $0x10] sm:$0xff]
    %v143 = vld [vmem:[#allocation7 + $0x18] sm:$0xff]
    %v144 = vld [vmem:[#allocation7 + $0x20] sm:$0xff]
    %v145 = vld [vmem:[#allocation7 + $0x28] sm:$0xff]
    %v146 = vld [vmem:[#allocation7 + $0x30] sm:$0xff]
    %v147 = vld [vmem:[#allocation7 + $0x38] sm:$0xff]
    %v148 = vld [vmem:[#allocation7 + $0x40] sm:$0xff]
    %v149 = vld [vmem:[#allocation7 + $0x48] sm:$0xff]
    %v150 = vld [vmem:[#allocation7 + $0x50] sm:$0xff]
    %v151 = vld [vmem:[#allocation7 + $0x58] sm:$0xff]
    %v152 = vld [vmem:[#allocation7 + $0x60] sm:$0xff]
    %v153 = vld [vmem:[#allocation7 + $0x68] sm:$0xff]
    %v154 = vld [vmem:[#allocation7 + $0x70] sm:$0xff]
    %v155 = vld [vmem:[#allocation7 + $0x78] sm:$0xff]
    %v156 = vld [vmem:[%s3 + $0x1] sm:$0x1]
    %v157 = vlaneseq
    %v158 = vshrl.u32 %v157, 7
    %v159 = vsub.s32 0, %v158
    %v160 = vrot.slane %v156, %v159
    %161 = vmatprep.subr.mxu0 0.0
    %162 = vmatpush1.msra.mxu0 %v140
    %163 = vmatprep.subr.mxu0 0.0
    %164 = vmatpush1.msra.mxu0 %v141
    %165 = vmatprep.subr.mxu0 0.0
    %166 = vmatpush1.msra.mxu0 %v142
    %167 = vmatprep.subr.mxu0 0.0
    %168 = vmatpush1.msra.mxu0 %v143
    %169 = vmatprep.subr.mxu0 0.0
    %170 = vmatpush1.msra.mxu0 %v144
    %171 = vmatprep.subr.mxu0 0.0
    %172 = vmatpush1.msra.mxu0 %v145
    %173 = vmatprep.subr.mxu0 0.0
    %174 = vmatpush1.msra.mxu0 %v146
    %175 = vmatprep.subr.mxu0 0.0
    %176 = vmatpush1.msra.mxu0 %v147
    %177 = vmatprep.subr.mxu0 0.0
    %178 = vmatpush1.msra.mxu0 %v148
    %179 = vmatprep.subr.mxu0 0.0
    %180 = vmatpush1.msra.mxu0 %v149
    %181 = vmatprep.subr.mxu0 0.0
    %182 = vmatpush1.msra.mxu0 %v150
    %183 = vmatprep.subr.mxu0 0.0
    %184 = vmatpush1.msra.mxu0 %v151
    %185 = vmatprep.subr.mxu0 0.0
    %186 = vmatpush1.msra.mxu0 %v152
    %187 = vmatprep.subr.mxu0 0.0
    %188 = vmatpush1.msra.mxu0 %v153
    %189 = vmatprep.subr.mxu0 0.0
    %190 = vmatpush1.msra.mxu0 %v154
    %191 = vmatprep.subr.mxu0 0.0
    %192 = vmatpush1.msra.mxu0 %v155
    %193 = vmatprep.subr.mxu0 0.0
    %194 = vmatpush1.msra.mxu0 0.0
    %195 = vmatprep.subr.mxu0 0.0
    %196 = vmatpush1.msra.mxu0 0.0
    %197 = vmatprep.subr.mxu0 0.0
    %198 = vmatpush1.msra.mxu0 0.0
    %199 = vmatprep.subr.mxu0 0.0
    %200 = vmatpush1.msra.mxu0 0.0
    %201 = vmatprep.subr.mxu0 0.0
    %202 = vmatpush1.msra.mxu0 0.0
    %203 = vmatprep.subr.mxu0 0.0
    %204 = vmatpush1.msra.mxu0 0.0
    %205 = vmatprep.subr.mxu0 0.0
    %206 = vmatpush1.msra.mxu0 0.0
    %207 = vmatprep.subr.mxu0 0.0
    %208 = vmatpush1.msra.mxu0 0.0
    %209 = vmatprep.subr.mxu0 0.0
    %210 = vmatpush1.msra.mxu0 0.0
    %211 = vmatprep.subr.mxu0 0.0
    %212 = vmatpush1.msra.mxu0 0.0
    %213 = vmatprep.subr.mxu0 0.0
    %214 = vmatpush1.msra.mxu0 0.0
    %215 = vmatprep.subr.mxu0 0.0
    %216 = vmatpush1.msra.mxu0 0.0
    %217 = vmatprep.subr.mxu0 0.0
    %218 = vmatpush1.msra.mxu0 0.0
    %219 = vmatprep.subr.mxu0 0.0
    %220 = vmatpush1.msra.mxu0 0.0
    %221 = vmatprep.subr.mxu0 0.0
    %222 = vmatpush1.msra.mxu0 0.0
    %223 = vmatprep.subr.mxu0 0.0
    %224 = vmatpush1.msra.mxu0 0.0
    %225 = vmatprep.mubr.f32.mxu0 0.0
    %226 = vmatmul.mubr.f32.gmra.mrb[0].mxu0 %v139
    %v227 = vpop.f32.mrb[0].mxu0
    %v228 = vadd.f32 %v160, %v227
    %v229 = vpop.f32.mrb[0].mxu0
    %230 = vdwg.mxu0
    %v231 = vtanh.pop %v228
    %s232 = scalar_lea.vmem [#allocation7], 128
    %v233 = vld [vmem:[%s232] sm:$0xff]
    %v234 = vld [vmem:[%s232 + $0x8] sm:$0xff]
    %v235 = vld [vmem:[%s232 + $0x10] sm:$0xff]
    %v236 = vld [vmem:[%s232 + $0x18] sm:$0xff]
    %v237 = vld [vmem:[%s232 + $0x20] sm:$0xff]
    %v238 = vld [vmem:[%s232 + $0x28] sm:$0xff]
    %v239 = vld [vmem:[%s232 + $0x30] sm:$0xff]
    %v240 = vld [vmem:[%s232 + $0x38] sm:$0xff]
    %v241 = vld [vmem:[%s232 + $0x40] sm:$0xff]
    %v242 = vld [vmem:[%s232 + $0x48] sm:$0xff]
    %v243 = vld [vmem:[%s232 + $0x50] sm:$0xff]
    %v244 = vld [vmem:[%s232 + $0x58] sm:$0xff]
    %v245 = vld [vmem:[%s232 + $0x60] sm:$0xff]
    %v246 = vld [vmem:[%s232 + $0x68] sm:$0xff]
    %v247 = vld [vmem:[%s232 + $0x70] sm:$0xff]
    %v248 = vld [vmem:[%s232 + $0x78] sm:$0xff]
    %v249 = vld [vmem:[%s3 + $0x2] sm:$0x1]
    %v250 = vlaneseq
    %v251 = vshrl.u32 %v250, 7
    %v252 = vsub.s32 0, %v251
    %v253 = vrot.slane %v249, %v252
    %254 = vmatprep.subr.mxu0 0.0
    %255 = vmatpush1.msra.mxu0 %v233
    %256 = vmatprep.subr.mxu0 0.0
    %257 = vmatpush1.msra.mxu0 %v234
    %258 = vmatprep.subr.mxu0 0.0
    %259 = vmatpush1.msra.mxu0 %v235
    %260 = vmatprep.subr.mxu0 0.0
    %261 = vmatpush1.msra.mxu0 %v236
    %262 = vmatprep.subr.mxu0 0.0
    %263 = vmatpush1.msra.mxu0 %v237
    %264 = vmatprep.subr.mxu0 0.0
    %265 = vmatpush1.msra.mxu0 %v238
    %266 = vmatprep.subr.mxu0 0.0
    %267 = vmatpush1.msra.mxu0 %v239
    %268 = vmatprep.subr.mxu0 0.0
    %269 = vmatpush1.msra.mxu0 %v240
    %270 = vmatprep.subr.mxu0 0.0
    %271 = vmatpush1.msra.mxu0 %v241
    %272 = vmatprep.subr.mxu0 0.0
    %273 = vmatpush1.msra.mxu0 %v242
    %274 = vmatprep.subr.mxu0 0.0
    %275 = vmatpush1.msra.mxu0 %v243
    %276 = vmatprep.subr.mxu0 0.0
    %277 = vmatpush1.msra.mxu0 %v244
    %278 = vmatprep.subr.mxu0 0.0
    %279 = vmatpush1.msra.mxu0 %v245
    %280 = vmatprep.subr.mxu0 0.0
    %281 = vmatpush1.msra.mxu0 %v246
    %282 = vmatprep.subr.mxu0 0.0
    %283 = vmatpush1.msra.mxu0 %v247
    %284 = vmatprep.subr.mxu0 0.0
    %285 = vmatpush1.msra.mxu0 %v248
    %286 = vmatprep.subr.mxu0 0.0
    %287 = vmatpush1.msra.mxu0 0.0
    %288 = vmatprep.subr.mxu0 0.0
    %289 = vmatpush1.msra.mxu0 0.0
    %290 = vmatprep.subr.mxu0 0.0
    %291 = vmatpush1.msra.mxu0 0.0
    %292 = vmatprep.subr.mxu0 0.0
    %293 = vmatpush1.msra.mxu0 0.0
    %294 = vmatprep.subr.mxu0 0.0
    %295 = vmatpush1.msra.mxu0 0.0
    %296 = vmatprep.subr.mxu0 0.0
    %297 = vmatpush1.msra.mxu0 0.0
    %298 = vmatprep.subr.mxu0 0.0
    %299 = vmatpush1.msra.mxu0 0.0
    %300 = vmatprep.subr.mxu0 0.0
    %301 = vmatpush1.msra.mxu0 0.0
    %302 = vmatprep.subr.mxu0 0.0
    %303 = vmatpush1.msra.mxu0 0.0
    %304 = vmatprep.subr.mxu0 0.0
    %305 = vmatpush1.msra.mxu0 0.0
    %306 = vmatprep.subr.mxu0 0.0
    %307 = vmatpush1.msra.mxu0 0.0
    %308 = vmatprep.subr.mxu0 0.0
    %309 = vmatpush1.msra.mxu0 0.0
    %310 = vmatprep.subr.mxu0 0.0
    %311 = vmatpush1.msra.mxu0 0.0
    %312 = vmatprep.subr.mxu0 0.0
    %313 = vmatpush1.msra.mxu0 0.0
    %314 = vmatprep.subr.mxu0 0.0
    %315 = vmatpush1.msra.mxu0 0.0
    %316 = vmatprep.subr.mxu0 0.0
    %317 = vmatpush1.msra.mxu0 0.0
    %318 = vmatprep.mubr.f32.mxu0 0.0
    %319 = vmatmul.mubr.f32.gmra.mrb[0].mxu0 %v231
    %v320 = vpop.f32.mrb[0].mxu0
    %v321 = vadd.f32 %v253, %v320
    %v322 = vpop.f32.mrb[0].mxu0
    %323 = vdwg.mxu0
    %v324 = vlaneseq
    %v325 = vand.u32 %v324, 127
    %vm326 = vcmp.lt.s32.totalorder %v325, 64
    %v327 = vsel %vm326, %v231, %v321
    %328 = vst [vmem:[#allocation8] sm:$0xff] %v327
    // Predicated region
    $region30: #{tpu_custom_call.1} parent=1 // pred_check
      _
    $region31: #{tpu_custom_call.1} parent=1 // pred_check_branch
      %330 = sbr.rel (0) target = $region33
    $region32: #{tpu_custom_call.1} parent=1 // pred_region
      %s332 = ssub.s32 128, 128
      %333 = vsyncadd [#allocation4], %s332
      %s335 = sshll.u32 [#allocation8], 4
      %s336 = int_to_ptr.vmem [resolvable:$true] %s335
      %338 = dma.vmem_to_hbm [thread:$0]  %s336, 128, %s4, [#allocation4]
    $region33: #{tpu_custom_call.1} parent=1 // pred_fallthru
      _
    // Predicated region
    $region34: #{tpu_custom_call.1} parent=1 // pred_check
      _
    $region35: #{tpu_custom_call.1} parent=1 // pred_check_branch
      %340 = sbr.rel (0) target = $region37
    $region36: #{tpu_custom_call.1} parent=1 // pred_region
      %341 = dma.done [#allocation4], 128
    $region37: #{tpu_custom_call.1} parent=1 // pred_fallthru
      _
    %342 = vsyncpa [#allocation3], 1
    %343 = vsyncpa [#allocation6], 1
    %344 = vsyncpa [#allocation4], 1

</llo_original>
